<compile_context>
chip_gen: v5e
topology: v5e:2x2
jax: 0.10.0
libtpu: 0.0.40
codegen_flags: <defaults>
</compile_context>

<pallas_src>
import functools

import jax
import jax.numpy as jnp
from jax.experimental import pallas as pl
from jax.experimental.pallas import tpu as pltpu

PAD = 128          # lane-padded width for the packed hidden layers
OUT_W = 8          # narrow lane width of the output slab (>= NUM_CLASSES)
NUM_CLASSES = 3


def _round_up(a, m):
    return (a + m - 1) // m * m


def _choose_tile(B):
    """Batch tile: big (512) for roofline, multiple of 16 (bf16 sublanes / v5e),
    and capped at ~half the batch so the grid has >=2 parallel steps on v7x."""
    preferred = 512
    half = _round_up(pl.cdiv(max(B, 1), 2), 16)
    return max(16, min(preferred, half))


def mlp_kernel(x_ref, w_ref, b_ref, o_ref, *, dim_input, num_classes):
    f32 = jnp.float32
    bf16 = jnp.bfloat16
    d = dim_input

    # fc1: raw (TB, d) f32 input, cast to bf16 in-kernel; the static K-slice of
    # the packed (zero-padded) fc1 weight replaces any wrapper-side lane pad.
    h = x_ref[...].astype(bf16)                                   # (TB, d)
    h = jnp.dot(h, w_ref[0, :d, :], preferred_element_type=f32)   # (TB, PAD) f32
    h = jnp.maximum(h + b_ref[0], 0.0).astype(bf16)

    # fc2 / fc3: bf16 MXU matmul, f32 accumulate; bias/ReLU in f32.
    for layer in (1, 2):
        h = jnp.dot(h, w_ref[layer], preferred_element_type=f32)
        h = jnp.maximum(h + b_ref[layer], 0.0).astype(bf16)

    # fc4 + masked softmax on the narrow output slab only.
    logits = jnp.dot(h, w_ref[3], preferred_element_type=f32) + b_ref[3]
    nw = o_ref.shape[-1]
    logits = logits[:, :nw]                                       # (TB, OUT_W)
    lane = jax.lax.broadcasted_iota(jnp.int32, logits.shape, dimension=1)
    logits = jnp.where(lane < num_classes, logits, -jnp.inf)
    m = jnp.max(logits, axis=-1, keepdims=True)
    e = jnp.exp(logits - m)                                       # padded lanes -> 0
    inv = pl.reciprocal(jnp.sum(e, axis=-1, keepdims=True), approx=True)
    o_ref[...] = e * inv


def mlp_forward(x, w_packed, b_packed, num_classes=NUM_CLASSES):
    """x: (B, dim_input) f32.  w_packed: (4,PAD,PAD) bf16.  b_packed: (4,1,PAD) f32."""
    B, d = x.shape
    P = w_packed.shape[-1]
    assert d <= P  # TODO(synk): generalize packing/K-tiling for dim_input > 128

    TB = _choose_tile(B)
    B_pad = _round_up(B, TB)
    if B_pad != B:
        # Pad only the batch axis of the raw f32 input (d*4 B/row, no 128-lane
        # f32 intermediate).  Padded rows produce valid-but-ignored outputs.
        x = jnp.pad(x, ((0, B_pad - B), (0, 0)))

    grid = (B_pad // TB,)
    out = pl.pallas_call(
        functools.partial(mlp_kernel, dim_input=d, num_classes=num_classes),
        out_shape=jax.ShapeDtypeStruct((B_pad, OUT_W), jnp.float32),
        grid=grid,
        in_specs=[
            pl.BlockSpec((TB, d), lambda i: (i, 0)),               # x: batch-tiled, raw width
            pl.BlockSpec(w_packed.shape, lambda i: (0, 0, 0)),     # weights: VMEM-resident
            pl.BlockSpec(b_packed.shape, lambda i: (0, 0, 0)),     # biases: VMEM-resident
        ],
        out_specs=pl.BlockSpec((TB, OUT_W), lambda i: (i, 0)),     # narrow output slab
        compiler_params=pltpu.CompilerParams(
            dimension_semantics=("parallel",)),
    )(x, w_packed, b_packed)

    return out[:B, :num_classes]


def init_params(key, dim_input, pad=PAD, num_classes=NUM_CLASSES):
    """Mirror the PyTorch module's init, pre-transposed to (in,out), padded to
    `pad` lanes, and packed: fc1-3 kaiming_normal_ (relu) + zero bias, fc4
    default Linear init (uniform +/- 1/sqrt(fan_in))."""
    assert dim_input <= pad  # TODO(synk): generalize packing for dim_input > 128
    ks = jax.random.split(key, 5)
    dims = [(dim_input, 50), (50, 30), (30, 10), (10, num_classes)]
    W = jnp.zeros((4, pad, pad), jnp.float32)
    Bv = jnp.zeros((4, 1, pad), jnp.float32)
    for i, (fan_in, fan_out) in enumerate(dims):
        if i < 3:
            std = (2.0 / fan_in) ** 0.5          # kaiming normal, relu
            w = std * jax.random.normal(ks[i], (fan_in, fan_out), jnp.float32)
            b = jnp.zeros((fan_out,), jnp.float32)
        else:
            bound = 1.0 / (fan_in ** 0.5)        # PyTorch default Linear init
            w = jax.random.uniform(ks[3], (fan_in, fan_out), jnp.float32, -bound, bound)
            b = jax.random.uniform(ks[4], (fan_out,), jnp.float32, -bound, bound)
        W = W.at[i, :fan_in, :fan_out].set(w)
        Bv = Bv.at[i, 0, :fan_out].set(b)
    return W.astype(jnp.bfloat16), Bv


def mlp_reference(x, w_packed, b_packed, num_classes=NUM_CLASSES):
    """Plain-JAX reference using the same bf16-operand / f32-accumulate math."""
    f32 = jnp.float32
    d = x.shape[1]
    h = x.astype(jnp.bfloat16)
    h = jnp.maximum(jnp.dot(h, w_packed[0, :d, :], preferred_element_type=f32)
                    + b_packed[0, 0], 0.0).astype(jnp.bfloat16)
    for i in (1, 2):
        h = jnp.maximum(jnp.dot(h, w_packed[i], preferred_element_type=f32)
                        + b_packed[i, 0], 0.0).astype(jnp.bfloat16)
    logits = jnp.dot(h, w_packed[3], preferred_element_type=f32) + b_packed[3, 0]
    return jax.nn.softmax(logits[:, :num_classes], axis=-1)


if __name__ == "__main__":
    key = jax.random.PRNGKey(0)
    k_param, k_x = jax.random.split(key)

    dim_input = 32
    batch = 8
    w_packed, b_packed = init_params(k_param, dim_input)
    x = jax.random.normal(k_x, (batch, dim_input), jnp.float32)

    out = jax.block_until_ready(mlp_forward(x, w_packed, b_packed))
    ref = mlp_reference(x, w_packed, b_packed)

    assert out.shape == (batch, NUM_CLASSES)
    # Tolerance accounts for the EUP approx-reciprocal in the kernel's softmax.
    assert jnp.allclose(out, ref, atol=2e-3, rtol=2e-3)
    assert jnp.allclose(jnp.sum(out, axis=-1), 1.0, atol=2e-3)

    print("KERNEL_OK")
</pallas_src>

<mosaic_0001>
module attributes {stable_mosaic.version = 11 : i64} {
  func.func @mlp_kernel(%arg0: i32, %arg1: memref<16x32xf32, #tpu.memory_space<vmem>>, %arg2: memref<4x128x128xbf16, #tpu.memory_space<vmem>>, %arg3: memref<4x1x128xf32, #tpu.memory_space<vmem>>, %arg4: memref<16x8xf32, #tpu.memory_space<vmem>>) attributes {dimension_semantics = [#tpu.dimension_semantics<parallel>], iteration_bounds = array<i64: 1>, scalar_prefetch = 0 : i64, scratch_operands = 0 : i64, tpu.core_type = #tpu.core_type<tc>, window_params = [{transform_indices = @transform_0, window_bounds = array<i64: 16, 32>}, {pipeline_mode = #tpu.pipeline_mode<synchronous>, transform_indices = @transform_1, window_bounds = array<i64: 4, 128, 128>}, {pipeline_mode = #tpu.pipeline_mode<synchronous>, transform_indices = @transform_2, window_bounds = array<i64: 4, 1, 128>}, {transform_indices = @transform_3, window_bounds = array<i64: 16, 8>}]} {
    %c0 = arith.constant 0 : index
    %c0_0 = arith.constant 0 : index
    %0 = vector.load %arg1[%c0, %c0_0] : memref<16x32xf32, #tpu.memory_space<vmem>>, vector<16x32xf32>
    %1 = arith.truncf %0 : vector<16x32xf32> to vector<16x32xbf16>
    %c0_1 = arith.constant 0 : index
    %c0_2 = arith.constant 0 : index
    %c0_3 = arith.constant 0 : index
    %2 = vector.load %arg2[%c0_1, %c0_2, %c0_3] : memref<4x128x128xbf16, #tpu.memory_space<vmem>>, vector<1x32x128xbf16>
    %3 = vector.shape_cast %2 : vector<1x32x128xbf16> to vector<32x128xbf16>
    %cst = arith.constant dense<0.000000e+00> : vector<16x128xf32>
    %4 = tpu.matmul %1, %3, %cst {dimension_numbers = #tpu.dot_dimension_numbers<[1], [0], [0], [1], [0, 0, 1, 1], [], []>} : vector<16x32xbf16>, vector<32x128xbf16>, vector<16x128xf32> -> vector<16x128xf32>
    %c0_4 = arith.constant 0 : index
    %c0_5 = arith.constant 0 : index
    %c0_6 = arith.constant 0 : index
    %5 = vector.load %arg3[%c0_4, %c0_5, %c0_6] : memref<4x1x128xf32, #tpu.memory_space<vmem>>, vector<1x1x128xf32>
    %6 = vector.shape_cast %5 : vector<1x1x128xf32> to vector<1x128xf32>
    %7 = vector.broadcast %6 : vector<1x128xf32> to vector<16x128xf32>
    %8 = arith.addf %4, %7 : vector<16x128xf32>
    %cst_7 = arith.constant 0.000000e+00 : f32
    %9 = vector.broadcast %cst_7 : f32 to vector<16x128xf32>
    %10 = arith.maximumf %8, %9 : vector<16x128xf32>
    %11 = arith.truncf %10 : vector<16x128xf32> to vector<16x128xbf16>
    %c1 = arith.constant 1 : index
    %c0_8 = arith.constant 0 : index
    %c0_9 = arith.constant 0 : index
    %12 = vector.load %arg2[%c1, %c0_8, %c0_9] : memref<4x128x128xbf16, #tpu.memory_space<vmem>>, vector<1x128x128xbf16>
    %13 = vector.shape_cast %12 : vector<1x128x128xbf16> to vector<128x128xbf16>
    %cst_10 = arith.constant dense<0.000000e+00> : vector<16x128xf32>
    %14 = tpu.matmul %11, %13, %cst_10 {dimension_numbers = #tpu.dot_dimension_numbers<[1], [0], [0], [1], [0, 0, 1, 1], [], []>} : vector<16x128xbf16>, vector<128x128xbf16>, vector<16x128xf32> -> vector<16x128xf32>
    %c1_11 = arith.constant 1 : index
    %c0_12 = arith.constant 0 : index
    %c0_13 = arith.constant 0 : index
    %15 = vector.load %arg3[%c1_11, %c0_12, %c0_13] : memref<4x1x128xf32, #tpu.memory_space<vmem>>, vector<1x1x128xf32>
    %16 = vector.shape_cast %15 : vector<1x1x128xf32> to vector<1x128xf32>
    %17 = vector.broadcast %16 : vector<1x128xf32> to vector<16x128xf32>
    %18 = arith.addf %14, %17 : vector<16x128xf32>
    %cst_14 = arith.constant 0.000000e+00 : f32
    %19 = vector.broadcast %cst_14 : f32 to vector<16x128xf32>
    %20 = arith.maximumf %18, %19 : vector<16x128xf32>
    %21 = arith.truncf %20 : vector<16x128xf32> to vector<16x128xbf16>
    %c2 = arith.constant 2 : index
    %c0_15 = arith.constant 0 : index
    %c0_16 = arith.constant 0 : index
    %22 = vector.load %arg2[%c2, %c0_15, %c0_16] : memref<4x128x128xbf16, #tpu.memory_space<vmem>>, vector<1x128x128xbf16>
    %23 = vector.shape_cast %22 : vector<1x128x128xbf16> to vector<128x128xbf16>
    %cst_17 = arith.constant dense<0.000000e+00> : vector<16x128xf32>
    %24 = tpu.matmul %21, %23, %cst_17 {dimension_numbers = #tpu.dot_dimension_numbers<[1], [0], [0], [1], [0, 0, 1, 1], [], []>} : vector<16x128xbf16>, vector<128x128xbf16>, vector<16x128xf32> -> vector<16x128xf32>
    %c2_18 = arith.constant 2 : index
    %c0_19 = arith.constant 0 : index
    %c0_20 = arith.constant 0 : index
    %25 = vector.load %arg3[%c2_18, %c0_19, %c0_20] : memref<4x1x128xf32, #tpu.memory_space<vmem>>, vector<1x1x128xf32>
    %26 = vector.shape_cast %25 : vector<1x1x128xf32> to vector<1x128xf32>
    %27 = vector.broadcast %26 : vector<1x128xf32> to vector<16x128xf32>
    %28 = arith.addf %24, %27 : vector<16x128xf32>
    %cst_21 = arith.constant 0.000000e+00 : f32
    %29 = vector.broadcast %cst_21 : f32 to vector<16x128xf32>
    %30 = arith.maximumf %28, %29 : vector<16x128xf32>
    %31 = arith.truncf %30 : vector<16x128xf32> to vector<16x128xbf16>
    %c3 = arith.constant 3 : index
    %c0_22 = arith.constant 0 : index
    %c0_23 = arith.constant 0 : index
    %32 = vector.load %arg2[%c3, %c0_22, %c0_23] : memref<4x128x128xbf16, #tpu.memory_space<vmem>>, vector<1x128x128xbf16>
    %33 = vector.shape_cast %32 : vector<1x128x128xbf16> to vector<128x128xbf16>
    %cst_24 = arith.constant dense<0.000000e+00> : vector<16x128xf32>
    %34 = tpu.matmul %31, %33, %cst_24 {dimension_numbers = #tpu.dot_dimension_numbers<[1], [0], [0], [1], [0, 0, 1, 1], [], []>} : vector<16x128xbf16>, vector<128x128xbf16>, vector<16x128xf32> -> vector<16x128xf32>
    %c3_25 = arith.constant 3 : index
    %c0_26 = arith.constant 0 : index
    %c0_27 = arith.constant 0 : index
    %35 = vector.load %arg3[%c3_25, %c0_26, %c0_27] : memref<4x1x128xf32, #tpu.memory_space<vmem>>, vector<1x1x128xf32>
    %36 = vector.shape_cast %35 : vector<1x1x128xf32> to vector<1x128xf32>
    %37 = vector.broadcast %36 : vector<1x128xf32> to vector<16x128xf32>
    %38 = arith.addf %34, %37 : vector<16x128xf32>
    %39 = vector.extract_strided_slice %38 {offsets = [0, 0], sizes = [16, 8], strides = [1, 1]} : vector<16x128xf32> to vector<16x8xf32>
    %40 = tpu.iota {dimensions = array<i32: 1>} : vector<16x8xi32>
    %c3_i32 = arith.constant 3 : i32
    %41 = vector.broadcast %c3_i32 : i32 to vector<16x8xi32>
    %42 = arith.cmpi slt, %40, %41 : vector<16x8xi32>
    %cst_28 = arith.constant 0xFF800000 : f32
    %43 = vector.broadcast %cst_28 : f32 to vector<16x8xf32>
    %44 = arith.select %42, %39, %43 : vector<16x8xi1>, vector<16x8xf32>
    %cst_29 = arith.constant dense<0xFF800000> : vector<16xf32>
    %45 = vector.multi_reduction <maximumf>, %44, %cst_29 [1] : vector<16x8xf32> to vector<16xf32>
    %46 = vector.shape_cast %45 : vector<16xf32> to vector<16x1xf32>
    %47 = vector.broadcast %46 : vector<16x1xf32> to vector<16x8xf32>
    %48 = arith.subf %44, %47 : vector<16x8xf32>
    %49 = math.exp %48 : vector<16x8xf32>
    %cst_30 = arith.constant dense<0.000000e+00> : vector<16xf32>
    %50 = vector.multi_reduction <add>, %49, %cst_30 [1] : vector<16x8xf32> to vector<16xf32>
    %51 = vector.shape_cast %50 : vector<16xf32> to vector<16x1xf32>
    %52 = tpu.reciprocal %51 {approx = true} : vector<16x1xf32> -> vector<16x1xf32>
    %53 = vector.broadcast %52 : vector<16x1xf32> to vector<16x8xf32>
    %54 = arith.mulf %49, %53 : vector<16x8xf32>
    %c0_31 = arith.constant 0 : index
    %c0_32 = arith.constant 0 : index
    %55 = vector.load %arg4[%c0_31, %c0_32] : memref<16x8xf32, #tpu.memory_space<vmem>>, vector<16x8xf32>
    tpu.vector_store %arg4[%c0_31, %c0_32], %54 {strides = array<i32>} : memref<16x8xf32, #tpu.memory_space<vmem>>, vector<16x8xf32>,
    return
  }
  func.func @transform_0(%arg0: i32) -> (i32, i32) {
    %c0_i32 = arith.constant 0 : i32
    %c0_i32_0 = arith.constant 0 : i32
    return %arg0, %c0_i32 : i32, i32
  }
  func.func @transform_1(%arg0: i32) -> (i32, i32, i32) {
    %c0_i32 = arith.constant 0 : i32
    %c0_i32_0 = arith.constant 0 : i32
    %c0_i32_1 = arith.constant 0 : i32
    %c0_i32_2 = arith.constant 0 : i32
    return %c0_i32, %c0_i32_0, %c0_i32_1 : i32, i32, i32
  }
  func.func @transform_2(%arg0: i32) -> (i32, i32, i32) {
    %c0_i32 = arith.constant 0 : i32
    %c0_i32_0 = arith.constant 0 : i32
    %c0_i32_1 = arith.constant 0 : i32
    %c0_i32_2 = arith.constant 0 : i32
    return %c0_i32, %c0_i32_0, %c0_i32_1 : i32, i32, i32
  }
  func.func @transform_3(%arg0: i32) -> (i32, i32) {
    %c0_i32 = arith.constant 0 : i32
    %c0_i32_0 = arith.constant 0 : i32
    return %arg0, %c0_i32 : i32, i32
  }
}

</mosaic_0001>

<llo_original>
// kernel: tpu_custom_call.1
$region0: #{tpu_custom_call.1}
  #allocation0 [shape = 'u32[]', space=smem, size = 0x4, offset = 0x4, fixed_abs, tag = 'smem constant byte address 0x4 - core index']
  #allocation1 [shape = 'u32[72,128]{1,0:T(1,128)}', space=vmem, size = 0x9000, scoped, tag = 'internal scratch']
  %s0 = inlined_call_operand.hbm [shape: f32[16,32], index: 0, kind: input, shape index: {}]
  %s1 = inlined_call_operand.hbm [shape: bf16[4,128,128], index: 1, kind: input, shape index: {}]
  %s2 = inlined_call_operand.hbm [shape: f32[4,1,128], index: 2, kind: input, shape index: {}]
  %s3 = inlined_call_operand.vmem [shape: f32[16,8], index: 3, kind: output, shape index: {}]
  %s4 = sld [smem:[#allocation0]]
  $region34: #{tpu_custom_call.1} parent=0
    _
  %s6 = ssub.s32 1, %s4
  %s7 = scalar_select 0, %s6, %s4
  $region1: #{tpu_custom_call.1} parent=0
    #allocation2 [shape = 'u8[8192]{0}', space=vmem, size = 0x2000, scoped, tag = 'input window, operand 0, single buffered']
    #allocation3 [shape = 's32[1]{0}', space=sflag, size = 0x4, scoped, tag = 'scoped memory for tpu_custom_call.1']
    #allocation4 [shape = 'u8[131072]{0}', space=vmem, size = 0x20000, scoped, tag = 'input window, operand 1, single buffered']
    #allocation5 [shape = 's32[1]{0}', space=sflag, size = 0x4, scoped, tag = 'scoped memory for tpu_custom_call.1']
    #allocation6 [shape = 'u8[2048]{0}', space=vmem, size = 0x800, scoped, tag = 'input window, operand 2, single buffered']
    %8 = vsyncpa [#allocation3], 0
    %9 = vsyncpa [#allocation5], 0
    // Predicated region
    $region2: #{tpu_custom_call.1} parent=1 // pred_check
      _
    $region3: #{tpu_custom_call.1} parent=1 // pred_check_branch
      %11 = sbr.rel (0) target = $region5
    $region4: #{tpu_custom_call.1} parent=1 // pred_region
      %13 = vsyncadd [#allocation3], 0
      %s14 = sshll.u32 %s0, 4
      %s15 = int_to_ptr.hbm [resolvable:$true] %s14
      %s16 = sshll.u32 [#allocation2], 4
      %s17 = int_to_ptr.vmem [resolvable:$true] %s16
      %22 = dma.hbm_to_vmem [thread:$0]  %s15, 256, %s17, [#allocation3], 128, 128, 8
    $region5: #{tpu_custom_call.1} parent=1 // pred_fallthru
      _
    // Predicated region
    $region6: #{tpu_custom_call.1} parent=1 // pred_check
      _
    $region7: #{tpu_custom_call.1} parent=1 // pred_check_branch
      %24 = sbr.rel (0) target = $region9
    $region8: #{tpu_custom_call.1} parent=1 // pred_region
      %26 = vsyncadd [#allocation5], 0
      %s27 = sshll.u32 %s1, 4
      %s28 = int_to_ptr.hbm [resolvable:$true] %s27
      %s29 = sshll.u32 [#allocation4], 4
      %s30 = int_to_ptr.vmem [resolvable:$true] %s29
      %35 = dma.hbm_to_vmem [thread:$0]  %s28, 4096, %s30, [#allocation5], 64, 64, 4
    $region9: #{tpu_custom_call.1} parent=1 // pred_fallthru
      _
    // Predicated region
    $region10: #{tpu_custom_call.1} parent=1 // pred_check
      _
    $region11: #{tpu_custom_call.1} parent=1 // pred_check_branch
      %37 = sbr.rel (0) target = $region13
    $region12: #{tpu_custom_call.1} parent=1 // pred_region
      %39 = vsyncadd [#allocation5], 0
      %s40 = sshll.u32 %s2, 4
      %s41 = int_to_ptr.hbm [resolvable:$true] %s40
      %s42 = sshll.u32 [#allocation6], 4
      %s43 = int_to_ptr.vmem [resolvable:$true] %s42
      %48 = dma.hbm_to_vmem [thread:$0]  %s41, 64, %s43, [#allocation5], 16, 16, 1
    $region13: #{tpu_custom_call.1} parent=1 // pred_fallthru
      _
    // Predicated region
    $region14: #{tpu_custom_call.1} parent=1 // pred_check
      _
    $region15: #{tpu_custom_call.1} parent=1 // pred_check_branch
      %50 = sbr.rel (0) target = $region17
    $region16: #{tpu_custom_call.1} parent=1 // pred_region
      %52 = dma.done [#allocation3], 256
    $region17: #{tpu_custom_call.1} parent=1 // pred_fallthru
      _
    // Predicated region
    $region18: #{tpu_custom_call.1} parent=1 // pred_check
      _
    $region19: #{tpu_custom_call.1} parent=1 // pred_check_branch
      %54 = sbr.rel (0) target = $region21
    $region20: #{tpu_custom_call.1} parent=1 // pred_region
      %56 = dma.done [#allocation5], 4096
    $region21: #{tpu_custom_call.1} parent=1 // pred_fallthru
      _
    // Predicated region
    $region22: #{tpu_custom_call.1} parent=1 // pred_check
      _
    $region23: #{tpu_custom_call.1} parent=1 // pred_check_branch
      %58 = sbr.rel (0) target = $region25
    $region24: #{tpu_custom_call.1} parent=1 // pred_region
      %60 = dma.done [#allocation5], 64
    $region25: #{tpu_custom_call.1} parent=1 // pred_fallthru
      _
    %v62 = vld [vmem:[#allocation2] sm:$0xff]
    %v63 = vld [vmem:[#allocation2 + $0x8] sm:$0xff]
    %v64 = vpack.c.bf16 %v63, %v62
    %v65 = vld [vmem:[#allocation4] sm:$0xf]
    %v66 = vld [vmem:[#allocation4 + $0x4] sm:$0xf]
    %v67 = vld [vmem:[#allocation4 + $0x8] sm:$0xf]
    %v68 = vld [vmem:[#allocation4 + $0xc] sm:$0xf]
    %v69 = vld [vmem:[#allocation6] sm:$0x1]
    %v71 = vperm.slane %v69, 0
    %v77 = vunpack.c.l.b16 %v65
    %v78 = vunpack.c.l.b16 %v66
    %v79 = vunpack.c.l.b16 %v67
    %v80 = vunpack.c.l.b16 %v68
    %v81 = vpack.c.b16 %v78, %v77
    %v82 = vpack.c.b16 %v80, %v79
    %vm85 = vcmask 261120
    %v87 = vsel %vm85, %v64, 0
    %89 = vmatpush.bf16.msra.mxu0 0
    %90 = vmatpush.bf16.msra.mxu0 0
    %91 = vmatpush.bf16.msra.mxu0 0
    %92 = vmatpush.bf16.msra.mxu0 0
    %93 = vmatpush.bf16.msra.mxu0 0
    %94 = vmatpush.bf16.msra.mxu0 0
    %95 = vmatpush.bf16.msra.mxu0 %v82
    %96 = vmatpush.bf16.msra.mxu0 %v81
    %97 = vmatmul.bf16.gmra.mxu0 %v87
    %v98 = vpop.f32.mrf.mxu0
    %v99 = vadd.f32 %v71, %v98
    %v100 = vpop.f32.mrf.mxu0
    %v101 = vadd.f32 %v71, %v100
    %102 = vdwg.mxu0
    %v103 = vmax.f32 %v99, 0.0
    %v104 = vmax.f32 %v101, 0.0
    %v105 = vpack.c.bf16 %v104, %v103
    %s106 = scalar_lea.vmem [#allocation4], 64
    %v107 = vld [vmem:[%s106] sm:$0xf]
    %v108 = vld [vmem:[%s106 + $0x4] sm:$0xf]
    %v109 = vld [vmem:[%s106 + $0x8] sm:$0xf]
    %v110 = vld [vmem:[%s106 + $0xc] sm:$0xf]
    %v111 = vld [vmem:[%s106 + $0x10] sm:$0xf]
    %v112 = vld [vmem:[%s106 + $0x14] sm:$0xf]
    %v113 = vld [vmem:[%s106 + $0x18] sm:$0xf]
    %v114 = vld [vmem:[%s106 + $0x1c] sm:$0xf]
    %v115 = vld [vmem:[%s106 + $0x20] sm:$0xf]
    %v116 = vld [vmem:[%s106 + $0x24] sm:$0xf]
    %v117 = vld [vmem:[%s106 + $0x28] sm:$0xf]
    %v118 = vld [vmem:[%s106 + $0x2c] sm:$0xf]
    %v119 = vld [vmem:[%s106 + $0x30] sm:$0xf]
    %v120 = vld [vmem:[%s106 + $0x34] sm:$0xf]
    %v121 = vld [vmem:[%s106 + $0x38] sm:$0xf]
    %v122 = vld [vmem:[%s106 + $0x3c] sm:$0xf]
    %s123 = scalar_lea.vmem [#allocation6], 1
    %v124 = vld [vmem:[%s123] sm:$0x1]
    %v126 = vperm.slane %v124, 0
    %v144 = vunpack.c.l.b16 %v107
    %v145 = vunpack.c.l.b16 %v108
    %v146 = vunpack.c.l.b16 %v109
    %v147 = vunpack.c.l.b16 %v110
    %v148 = vunpack.c.l.b16 %v111
    %v149 = vunpack.c.l.b16 %v112
    %v150 = vunpack.c.l.b16 %v113
    %v151 = vunpack.c.l.b16 %v114
    %v152 = vunpack.c.l.b16 %v115
    %v153 = vunpack.c.l.b16 %v116
    %v154 = vunpack.c.l.b16 %v117
    %v155 = vunpack.c.l.b16 %v118
    %v156 = vunpack.c.l.b16 %v119
    %v157 = vunpack.c.l.b16 %v120
    %v158 = vunpack.c.l.b16 %v121
    %v159 = vunpack.c.l.b16 %v122
    %v160 = vpack.c.b16 %v145, %v144
    %v161 = vpack.c.b16 %v147, %v146
    %v162 = vpack.c.b16 %v149, %v148
    %v163 = vpack.c.b16 %v151, %v150
    %v164 = vpack.c.b16 %v153, %v152
    %v165 = vpack.c.b16 %v155, %v154
    %v166 = vpack.c.b16 %v157, %v156
    %v167 = vpack.c.b16 %v159, %v158
    %176 = vmatpush.bf16.msra.mxu0 %v167
    %177 = vmatpush.bf16.msra.mxu0 %v166
    %178 = vmatpush.bf16.msra.mxu0 %v165
    %179 = vmatpush.bf16.msra.mxu0 %v164
    %180 = vmatpush.bf16.msra.mxu0 %v163
    %181 = vmatpush.bf16.msra.mxu0 %v162
    %182 = vmatpush.bf16.msra.mxu0 %v161
    %183 = vmatpush.bf16.msra.mxu0 %v160
    %184 = vmatmul.bf16.gmra.mxu0 %v105
    %v185 = vpop.f32.mrf.mxu0
    %v186 = vadd.f32 %v126, %v185
    %v187 = vpop.f32.mrf.mxu0
    %v188 = vadd.f32 %v126, %v187
    %189 = vdwg.mxu0
    %v190 = vmax.f32 %v186, 0.0
    %v191 = vmax.f32 %v188, 0.0
    %v192 = vpack.c.bf16 %v191, %v190
    %s193 = scalar_lea.vmem [#allocation4], 128
    %v194 = vld [vmem:[%s193] sm:$0xf]
    %v195 = vld [vmem:[%s193 + $0x4] sm:$0xf]
    %v196 = vld [vmem:[%s193 + $0x8] sm:$0xf]
    %v197 = vld [vmem:[%s193 + $0xc] sm:$0xf]
    %v198 = vld [vmem:[%s193 + $0x10] sm:$0xf]
    %v199 = vld [vmem:[%s193 + $0x14] sm:$0xf]
    %v200 = vld [vmem:[%s193 + $0x18] sm:$0xf]
    %v201 = vld [vmem:[%s193 + $0x1c] sm:$0xf]
    %v202 = vld [vmem:[%s193 + $0x20] sm:$0xf]
    %v203 = vld [vmem:[%s193 + $0x24] sm:$0xf]
    %v204 = vld [vmem:[%s193 + $0x28] sm:$0xf]
    %v205 = vld [vmem:[%s193 + $0x2c] sm:$0xf]
    %v206 = vld [vmem:[%s193 + $0x30] sm:$0xf]
    %v207 = vld [vmem:[%s193 + $0x34] sm:$0xf]
    %v208 = vld [vmem:[%s193 + $0x38] sm:$0xf]
    %v209 = vld [vmem:[%s193 + $0x3c] sm:$0xf]
    %s210 = scalar_lea.vmem [#allocation6], 2
    %v211 = vld [vmem:[%s210] sm:$0x1]
    %v213 = vperm.slane %v211, 0
    %v231 = vunpack.c.l.b16 %v194
    %v232 = vunpack.c.l.b16 %v195
    %v233 = vunpack.c.l.b16 %v196
    %v234 = vunpack.c.l.b16 %v197
    %v235 = vunpack.c.l.b16 %v198
    %v236 = vunpack.c.l.b16 %v199
    %v237 = vunpack.c.l.b16 %v200
    %v238 = vunpack.c.l.b16 %v201
    %v239 = vunpack.c.l.b16 %v202
    %v240 = vunpack.c.l.b16 %v203
    %v241 = vunpack.c.l.b16 %v204
    %v242 = vunpack.c.l.b16 %v205
    %v243 = vunpack.c.l.b16 %v206
    %v244 = vunpack.c.l.b16 %v207
    %v245 = vunpack.c.l.b16 %v208
    %v246 = vunpack.c.l.b16 %v209
    %v247 = vpack.c.b16 %v232, %v231
    %v248 = vpack.c.b16 %v234, %v233
    %v249 = vpack.c.b16 %v236, %v235
    %v250 = vpack.c.b16 %v238, %v237
    %v251 = vpack.c.b16 %v240, %v239
    %v252 = vpack.c.b16 %v242, %v241
    %v253 = vpack.c.b16 %v244, %v243
    %v254 = vpack.c.b16 %v246, %v245
    %263 = vmatpush.bf16.msra.mxu0 %v254
    %264 = vmatpush.bf16.msra.mxu0 %v253
    %265 = vmatpush.bf16.msra.mxu0 %v252
    %266 = vmatpush.bf16.msra.mxu0 %v251
    %267 = vmatpush.bf16.msra.mxu0 %v250
    %268 = vmatpush.bf16.msra.mxu0 %v249
    %269 = vmatpush.bf16.msra.mxu0 %v248
    %270 = vmatpush.bf16.msra.mxu0 %v247
    %271 = vmatmul.bf16.gmra.mxu0 %v192
    %v272 = vpop.f32.mrf.mxu0
    %v273 = vadd.f32 %v213, %v272
    %v274 = vpop.f32.mrf.mxu0
    %v275 = vadd.f32 %v213, %v274
    %276 = vdwg.mxu0
    %v277 = vmax.f32 %v273, 0.0
    %v278 = vmax.f32 %v275, 0.0
    %v279 = vpack.c.bf16 %v278, %v277
    %s280 = scalar_lea.vmem [#allocation4], 192
    %v281 = vld [vmem:[%s280] sm:$0xf]
    %v282 = vld [vmem:[%s280 + $0x4] sm:$0xf]
    %v283 = vld [vmem:[%s280 + $0x8] sm:$0xf]
    %v284 = vld [vmem:[%s280 + $0xc] sm:$0xf]
    %v285 = vld [vmem:[%s280 + $0x10] sm:$0xf]
    %v286 = vld [vmem:[%s280 + $0x14] sm:$0xf]
    %v287 = vld [vmem:[%s280 + $0x18] sm:$0xf]
    %v288 = vld [vmem:[%s280 + $0x1c] sm:$0xf]
    %v289 = vld [vmem:[%s280 + $0x20] sm:$0xf]
    %v290 = vld [vmem:[%s280 + $0x24] sm:$0xf]
    %v291 = vld [vmem:[%s280 + $0x28] sm:$0xf]
    %v292 = vld [vmem:[%s280 + $0x2c] sm:$0xf]
    %v293 = vld [vmem:[%s280 + $0x30] sm:$0xf]
    %v294 = vld [vmem:[%s280 + $0x34] sm:$0xf]
    %v295 = vld [vmem:[%s280 + $0x38] sm:$0xf]
    %v296 = vld [vmem:[%s280 + $0x3c] sm:$0xf]
    %s297 = scalar_lea.vmem [#allocation6], 3
    %v298 = vld [vmem:[%s297] sm:$0x1]
    %v300 = vperm.slane %v298, 0
    %v318 = vunpack.c.l.b16 %v281
    %v319 = vunpack.c.l.b16 %v282
    %v320 = vunpack.c.l.b16 %v283
    %v321 = vunpack.c.l.b16 %v284
    %v322 = vunpack.c.l.b16 %v285
    %v323 = vunpack.c.l.b16 %v286
    %v324 = vunpack.c.l.b16 %v287
    %v325 = vunpack.c.l.b16 %v288
    %v326 = vunpack.c.l.b16 %v289
    %v327 = vunpack.c.l.b16 %v290
    %v328 = vunpack.c.l.b16 %v291
    %v329 = vunpack.c.l.b16 %v292
    %v330 = vunpack.c.l.b16 %v293
    %v331 = vunpack.c.l.b16 %v294
    %v332 = vunpack.c.l.b16 %v295
    %v333 = vunpack.c.l.b16 %v296
    %v334 = vpack.c.b16 %v319, %v318
    %v335 = vpack.c.b16 %v321, %v320
    %v336 = vpack.c.b16 %v323, %v322
    %v337 = vpack.c.b16 %v325, %v324
    %v338 = vpack.c.b16 %v327, %v326
    %v339 = vpack.c.b16 %v329, %v328
    %v340 = vpack.c.b16 %v331, %v330
    %v341 = vpack.c.b16 %v333, %v332
    %350 = vmatpush.bf16.msra.mxu0 %v341
    %351 = vmatpush.bf16.msra.mxu0 %v340
    %352 = vmatpush.bf16.msra.mxu0 %v339
    %353 = vmatpush.bf16.msra.mxu0 %v338
    %354 = vmatpush.bf16.msra.mxu0 %v337
    %355 = vmatpush.bf16.msra.mxu0 %v336
    %356 = vmatpush.bf16.msra.mxu0 %v335
    %357 = vmatpush.bf16.msra.mxu0 %v334
    %358 = vmatmul.bf16.gmra.mxu0 %v279
    %v359 = vpop.f32.mrf.mxu0
    %v360 = vadd.f32 %v300, %v359
    %v361 = vpop.f32.mrf.mxu0
    %v362 = vadd.f32 %v300, %v361
    %363 = vdwg.mxu0
    %v364 = vlaneseq
    %v365 = vand.u32 %v364, 127
    %vm366 = vcmp.lt.s32.totalorder %v365, 3
    %v367 = vsel %vm366, %v360, -inf
    %v368 = vsel %vm366, %v362, -inf
    %vm369 = vcmask 64512
    %v370 = vsel %vm369, %v367, -inf
    %371 = vmax.xlane.f32.xlu0 %v370
    %v372 = vpop.xlane.xlu0 %371
    %v373 = vsel %vm369, %v368, -inf
    %374 = vmax.xlane.f32.xlu0 %v373
    %v375 = vpop.xlane.xlu0 %374
    %v376 = vsub.f32 %v367, %v372
    %v377 = vsub.f32 %v368, %v375
    %v378 = vmul.f32 %v376, 1.442695
    %v379 = vpow.pop %v378
    %v380 = vmul.f32 %v377, 1.442695
    %v381 = vpow.pop %v380
    %v382 = vsel %vm369, %v379, 0.0
    %383 = vadd.xlane.f32.xlu0 %v382
    %v384 = vpop.xlane.xlu0 %383
    %v385 = vsel %vm369, %v381, 0.0
    %386 = vadd.xlane.f32.xlu0 %v385
    %v387 = vpop.xlane.xlu0 %386
    %v388 = vrcp.pop %v384
    %v389 = vrcp.pop %v387
    %v390 = vmul.f32 %v379, %v388
    %v391 = vmul.f32 %v381, %v389
    %392 = vst.msk [vmem:[%s3] sm:$0xff] %vm369, %v390
    %393 = vst.msk [vmem:[%s3 + $0x8] sm:$0xff] %vm369, %v391
    // Predicated region
    $region26: #{tpu_custom_call.1} parent=1 // pred_check
      _
    $region27: #{tpu_custom_call.1} parent=1 // pred_check_branch
      %395 = sbr.rel (0) target = $region29
    $region28: #{tpu_custom_call.1} parent=1 // pred_region
      _
    $region29: #{tpu_custom_call.1} parent=1 // pred_fallthru
      _
    // Predicated region
    $region30: #{tpu_custom_call.1} parent=1 // pred_check
      _
    $region31: #{tpu_custom_call.1} parent=1 // pred_check_branch
      %397 = sbr.rel (0) target = $region33
    $region32: #{tpu_custom_call.1} parent=1 // pred_region
      _
    $region33: #{tpu_custom_call.1} parent=1 // pred_fallthru
      _
    %398 = vsyncpa [#allocation3], 1
    %399 = vsyncpa [#allocation5], 1

</llo_original>
